<compile_context>
chip_gen: v7x
topology: tpu7x:2x2x1
jax: 0.10.0
libtpu: 0.0.40
codegen_flags: <defaults>
</compile_context>

<pallas_src>
import functools

import jax
import jax.numpy as jnp
from jax import lax
from jax.experimental import pallas as pl
from jax.experimental.pallas import tpu as pltpu

LANE = 128


def _round_up(x, m):
    return ((x + m - 1) // m) * m


def _mdn_kernel(x_ref, wh_ref, bh_ref, whd_ref, bhd_ref, out_ref, *, n_gaussians):
    G = n_gaussians

    x = x_ref[...]                                             # [bt, n_in]

    # Hidden layer: Linear + Tanh (f32 accumulation on the MXU).
    h = jnp.tanh(
        jnp.dot(x, wh_ref[...], preferred_element_type=jnp.float32) + bh_ref[...]
    )                                                          # [bt, n_hidden] f32

    # Fused heads: one lane-dense matmul covering pi|sigma|mu (+ zero padding).
    z = (
        jnp.dot(h.astype(whd_ref.dtype), whd_ref[...],
                preferred_element_type=jnp.float32)
        + bhd_ref[...]
    )                                                          # [bt, 128] f32

    col = lax.broadcasted_iota(jnp.int32, z.shape, 1)
    is_pi = col < G
    is_sigma = (col >= G) & (col < 2 * G)
    is_mu = (col >= 2 * G) & (col < 3 * G)

    # Masked, max-stabilized softmax over the pi lanes only.
    z_pi = jnp.where(is_pi, z, -jnp.inf)
    m = jnp.max(z_pi, axis=-1, keepdims=True)
    e = jnp.exp(z_pi - m)                                      # 0 on non-pi lanes
    s = jnp.sum(e, axis=-1, keepdims=True)
    pi_vals = e * pl.reciprocal(s, approx=True)

    # sigma = exp(.) on its lanes (guard the argument so padding never overflows).
    sigma_vals = jnp.exp(jnp.where(is_sigma, z, 0.0))

    out = jnp.where(
        is_pi, pi_vals,
        jnp.where(is_sigma, sigma_vals,
                  jnp.where(is_mu, z, 0.0)))
    out_ref[...] = out                                         # lane-dense store


def mdn_forward(x, params, *, block_b=512, compute_dtype=jnp.float32):
    """x: [B, n_inputs] float32. params: dict from init_params.

    compute_dtype=jnp.bfloat16 halves weight/activation DMA and doubles MXU
    throughput on v6e/v7x (accumulation stays f32); element-wise math is f32
    either way.
    """
    B, n_in = x.shape
    n_hidden = params["w_h"].shape[1]
    G = params["w_pi"].shape[1]

    # --- Fuse head weights into one lane-dense [n_hidden, 128k] matrix. ---
    w_heads = jnp.concatenate(
        [params["w_pi"], params["w_sigma"], params["w_mu"]], axis=1)   # [H, 3G]
    b_heads = jnp.concatenate(
        [params["b_pi"], params["b_sigma"], params["b_mu"]], axis=1)   # [1, 3G]
    n_out = 3 * G
    n_pad = _round_up(max(n_out, LANE), LANE)
    w_heads = jnp.pad(w_heads, ((0, 0), (0, n_pad - n_out)))
    b_heads = jnp.pad(b_heads, ((0, 0), (0, n_pad - n_out)))

    xc = x.astype(compute_dtype)
    w_h = params["w_h"].astype(compute_dtype)
    w_heads = w_heads.astype(compute_dtype)
    b_h = params["b_h"].astype(jnp.float32)
    b_heads = b_heads.astype(jnp.float32)

    # --- Batch tiling: multiple-of-8 tile, pad batch so the grid divides. ---
    bt = min(block_b, _round_up(B, 8))
    bt = _round_up(bt, 8)
    Bp = _round_up(B, bt)
    if Bp != B:
        xc = jnp.pad(xc, ((0, Bp - B), (0, 0)))

    kernel = functools.partial(_mdn_kernel, n_gaussians=G)

    out = pl.pallas_call(
        kernel,
        out_shape=jax.ShapeDtypeStruct((Bp, n_pad), jnp.float32),
        grid_spec=pltpu.PrefetchScalarGridSpec(
            num_scalar_prefetch=0,
            grid=(Bp // bt,),
            in_specs=[
                pl.BlockSpec((bt, n_in), lambda i: (i, 0)),        # x (streamed)
                pl.BlockSpec((n_in, n_hidden), lambda i: (0, 0)),  # weights resident
                pl.BlockSpec((1, n_hidden), lambda i: (0, 0)),
                pl.BlockSpec((n_hidden, n_pad), lambda i: (0, 0)),
                pl.BlockSpec((1, n_pad), lambda i: (0, 0)),
            ],
            out_specs=pl.BlockSpec((bt, n_pad), lambda i: (i, 0)), # packed output
        ),
        compiler_params=pltpu.CompilerParams(
            dimension_semantics=("parallel",),   # shard batch axis across TCs (v7x)
        ),
    )(xc, w_h, b_h, w_heads, b_heads)

    pi = out[:B, :G]
    sigma = out[:B, G:2 * G]
    mu = out[:B, 2 * G:3 * G]
    return pi, sigma, mu


def init_params(key, n_inputs, n_hidden, n_gaussians):
    """Deterministic synthetic init (PyTorch-Linear-style uniform ranges)."""
    ks = jax.random.split(key, 8)

    def linear(kw, kb, fan_in, fan_out):
        bound = 1.0 / jnp.sqrt(fan_in)
        w = jax.random.uniform(kw, (fan_in, fan_out), jnp.float32, -bound, bound)
        b = jax.random.uniform(kb, (1, fan_out), jnp.float32, -bound, bound)
        return w, b

    w_h, b_h = linear(ks[0], ks[1], n_inputs, n_hidden)
    w_pi, b_pi = linear(ks[2], ks[3], n_hidden, n_gaussians)
    w_sigma, b_sigma = linear(ks[4], ks[5], n_hidden, n_gaussians)
    w_mu, b_mu = linear(ks[6], ks[7], n_hidden, n_gaussians)
    return {
        "w_h": w_h, "b_h": b_h,
        "w_pi": w_pi, "b_pi": b_pi,
        "w_sigma": w_sigma, "b_sigma": b_sigma,
        "w_mu": w_mu, "b_mu": b_mu,
    }


def mdn_forward_ref(x, p):
    """Pure-JAX reference mirroring the PyTorch forward."""
    h = jnp.tanh(x @ p["w_h"] + p["b_h"])
    pi = jax.nn.softmax(h @ p["w_pi"] + p["b_pi"], axis=-1)
    sigma = jnp.exp(h @ p["w_sigma"] + p["b_sigma"])
    mu = h @ p["w_mu"] + p["b_mu"]
    return pi, sigma, mu


if __name__ == "__main__":
    B, n_inputs, n_hidden, n_gaussians = 64, 16, 32, 8

    key = jax.random.PRNGKey(0)
    k_x, k_p = jax.random.split(key)
    x = jax.random.normal(k_x, (B, n_inputs), jnp.float32)
    params = init_params(k_p, n_inputs, n_hidden, n_gaussians)

    # Small batch tile (16 rows) so the batch grid (4 steps) is exercised.
    pi, sigma, mu = mdn_forward(x, params, block_b=16)
    jax.block_until_ready((pi, sigma, mu))

    # Correctness check against the pure-JAX reference.
    pi_r, sigma_r, mu_r = mdn_forward_ref(x, params)
    # pi uses the EUP approximate reciprocal -> slightly looser tolerance.
    assert jnp.allclose(pi, pi_r, atol=1e-3, rtol=1e-3)
    assert jnp.allclose(sigma, sigma_r, atol=1e-5, rtol=1e-5)
    assert jnp.allclose(mu, mu_r, atol=1e-5, rtol=1e-5)

    print("KERNEL_OK")
</pallas_src>

<mosaic_0001>
module attributes {stable_mosaic.version = 11 : i64} {
  func.func @_mdn_kernel(%arg0: i32, %arg1: memref<16x16xf32, #tpu.memory_space<vmem>>, %arg2: memref<16x32xf32, #tpu.memory_space<vmem>>, %arg3: memref<1x32xf32, #tpu.memory_space<vmem>>, %arg4: memref<32x128xf32, #tpu.memory_space<vmem>>, %arg5: memref<1x128xf32, #tpu.memory_space<vmem>>, %arg6: memref<16x128xf32, #tpu.memory_space<vmem>>) attributes {dimension_semantics = [#tpu.dimension_semantics<parallel>], iteration_bounds = array<i64: 4>, scalar_prefetch = 0 : i64, scratch_operands = 0 : i64, tpu.core_type = #tpu.core_type<tc>, window_params = [{transform_indices = @transform_0, window_bounds = array<i64: 16, 16>}, {pipeline_mode = #tpu.pipeline_mode<synchronous>, transform_indices = @transform_1, window_bounds = array<i64: 16, 32>}, {pipeline_mode = #tpu.pipeline_mode<synchronous>, transform_indices = @transform_2, window_bounds = array<i64: 1, 32>}, {pipeline_mode = #tpu.pipeline_mode<synchronous>, transform_indices = @transform_3, window_bounds = array<i64: 32, 128>}, {pipeline_mode = #tpu.pipeline_mode<synchronous>, transform_indices = @transform_4, window_bounds = array<i64: 1, 128>}, {transform_indices = @transform_5, window_bounds = array<i64: 16, 128>}]} {
    %c0 = arith.constant 0 : index
    %c0_0 = arith.constant 0 : index
    %0 = vector.load %arg1[%c0, %c0_0] : memref<16x16xf32, #tpu.memory_space<vmem>>, vector<16x16xf32>
    %c0_1 = arith.constant 0 : index
    %c0_2 = arith.constant 0 : index
    %1 = vector.load %arg2[%c0_1, %c0_2] : memref<16x32xf32, #tpu.memory_space<vmem>>, vector<16x32xf32>
    %cst = arith.constant dense<0.000000e+00> : vector<16x32xf32>
    %2 = tpu.matmul %0, %1, %cst {dimension_numbers = #tpu.dot_dimension_numbers<[1], [0], [0], [1], [0, 0, 1, 1], [], []>} : vector<16x16xf32>, vector<16x32xf32>, vector<16x32xf32> -> vector<16x32xf32>
    %c0_3 = arith.constant 0 : index
    %c0_4 = arith.constant 0 : index
    %3 = vector.load %arg3[%c0_3, %c0_4] : memref<1x32xf32, #tpu.memory_space<vmem>>, vector<1x32xf32>
    %4 = vector.broadcast %3 : vector<1x32xf32> to vector<16x32xf32>
    %5 = arith.addf %2, %4 : vector<16x32xf32>
    %6 = math.tanh %5 : vector<16x32xf32>
    %c0_5 = arith.constant 0 : index
    %c0_6 = arith.constant 0 : index
    %7 = vector.load %arg4[%c0_5, %c0_6] : memref<32x128xf32, #tpu.memory_space<vmem>>, vector<32x128xf32>
    %cst_7 = arith.constant dense<0.000000e+00> : vector<16x128xf32>
    %8 = tpu.matmul %6, %7, %cst_7 {dimension_numbers = #tpu.dot_dimension_numbers<[1], [0], [0], [1], [0, 0, 1, 1], [], []>} : vector<16x32xf32>, vector<32x128xf32>, vector<16x128xf32> -> vector<16x128xf32>
    %c0_8 = arith.constant 0 : index
    %c0_9 = arith.constant 0 : index
    %9 = vector.load %arg5[%c0_8, %c0_9] : memref<1x128xf32, #tpu.memory_space<vmem>>, vector<1x128xf32>
    %10 = vector.broadcast %9 : vector<1x128xf32> to vector<16x128xf32>
    %11 = arith.addf %8, %10 : vector<16x128xf32>
    %12 = tpu.iota {dimensions = array<i32: 1>} : vector<16x128xi32>
    %c8_i32 = arith.constant 8 : i32
    %13 = vector.broadcast %c8_i32 : i32 to vector<16x128xi32>
    %14 = arith.cmpi slt, %12, %13 : vector<16x128xi32>
    %c8_i32_10 = arith.constant 8 : i32
    %15 = vector.broadcast %c8_i32_10 : i32 to vector<16x128xi32>
    %16 = arith.cmpi sge, %12, %15 : vector<16x128xi32>
    %c16_i32 = arith.constant 16 : i32
    %17 = vector.broadcast %c16_i32 : i32 to vector<16x128xi32>
    %18 = arith.cmpi slt, %12, %17 : vector<16x128xi32>
    %19 = arith.andi %16, %18 : vector<16x128xi1>
    %c16_i32_11 = arith.constant 16 : i32
    %20 = vector.broadcast %c16_i32_11 : i32 to vector<16x128xi32>
    %21 = arith.cmpi sge, %12, %20 : vector<16x128xi32>
    %c24_i32 = arith.constant 24 : i32
    %22 = vector.broadcast %c24_i32 : i32 to vector<16x128xi32>
    %23 = arith.cmpi slt, %12, %22 : vector<16x128xi32>
    %24 = arith.andi %21, %23 : vector<16x128xi1>
    %cst_12 = arith.constant 0xFF800000 : f32
    %25 = vector.broadcast %cst_12 : f32 to vector<16x128xf32>
    %26 = arith.select %14, %11, %25 : vector<16x128xi1>, vector<16x128xf32>
    %cst_13 = arith.constant dense<0xFF800000> : vector<16xf32>
    %27 = vector.multi_reduction <maximumf>, %26, %cst_13 [1] : vector<16x128xf32> to vector<16xf32>
    %28 = vector.shape_cast %27 : vector<16xf32> to vector<16x1xf32>
    %29 = vector.broadcast %28 : vector<16x1xf32> to vector<16x128xf32>
    %30 = arith.subf %26, %29 : vector<16x128xf32>
    %31 = math.exp %30 : vector<16x128xf32>
    %cst_14 = arith.constant dense<0.000000e+00> : vector<16xf32>
    %32 = vector.multi_reduction <add>, %31, %cst_14 [1] : vector<16x128xf32> to vector<16xf32>
    %33 = vector.shape_cast %32 : vector<16xf32> to vector<16x1xf32>
    %34 = tpu.reciprocal %33 {approx = true} : vector<16x1xf32> -> vector<16x1xf32>
    %35 = vector.broadcast %34 : vector<16x1xf32> to vector<16x128xf32>
    %36 = arith.mulf %31, %35 : vector<16x128xf32>
    %cst_15 = arith.constant 0.000000e+00 : f32
    %37 = vector.broadcast %cst_15 : f32 to vector<16x128xf32>
    %38 = arith.select %19, %11, %37 : vector<16x128xi1>, vector<16x128xf32>
    %39 = math.exp %38 : vector<16x128xf32>
    %cst_16 = arith.constant 0.000000e+00 : f32
    %40 = vector.broadcast %cst_16 : f32 to vector<16x128xf32>
    %41 = arith.select %24, %11, %40 : vector<16x128xi1>, vector<16x128xf32>
    %42 = arith.select %19, %39, %41 : vector<16x128xi1>, vector<16x128xf32>
    %43 = arith.select %14, %36, %42 : vector<16x128xi1>, vector<16x128xf32>
    %c0_17 = arith.constant 0 : index
    %c0_18 = arith.constant 0 : index
    %44 = vector.load %arg6[%c0_17, %c0_18] : memref<16x128xf32, #tpu.memory_space<vmem>>, vector<16x128xf32>
    tpu.vector_store %arg6[%c0_17, %c0_18], %43 {strides = array<i32>} : memref<16x128xf32, #tpu.memory_space<vmem>>, vector<16x128xf32>,
    return
  }
  func.func @transform_0(%arg0: i32) -> (i32, i32) {
    %c0_i32 = arith.constant 0 : i32
    %c0_i32_0 = arith.constant 0 : i32
    return %arg0, %c0_i32 : i32, i32
  }
  func.func @transform_1(%arg0: i32) -> (i32, i32) {
    %c0_i32 = arith.constant 0 : i32
    %c0_i32_0 = arith.constant 0 : i32
    %c0_i32_1 = arith.constant 0 : i32
    return %c0_i32, %c0_i32_0 : i32, i32
  }
  func.func @transform_2(%arg0: i32) -> (i32, i32) {
    %c0_i32 = arith.constant 0 : i32
    %c0_i32_0 = arith.constant 0 : i32
    %c0_i32_1 = arith.constant 0 : i32
    return %c0_i32, %c0_i32_0 : i32, i32
  }
  func.func @transform_3(%arg0: i32) -> (i32, i32) {
    %c0_i32 = arith.constant 0 : i32
    %c0_i32_0 = arith.constant 0 : i32
    %c0_i32_1 = arith.constant 0 : i32
    return %c0_i32, %c0_i32_0 : i32, i32
  }
  func.func @transform_4(%arg0: i32) -> (i32, i32) {
    %c0_i32 = arith.constant 0 : i32
    %c0_i32_0 = arith.constant 0 : i32
    %c0_i32_1 = arith.constant 0 : i32
    return %c0_i32, %c0_i32_0 : i32, i32
  }
  func.func @transform_5(%arg0: i32) -> (i32, i32) {
    %c0_i32 = arith.constant 0 : i32
    %c0_i32_0 = arith.constant 0 : i32
    return %arg0, %c0_i32 : i32, i32
  }
}

</mosaic_0001>

<llo_original>
// kernel: tpu_custom_call.1
$region0: #{tpu_custom_call.1}
  #allocation0 [shape = 'u32[]', space=smem, size = 0x4, offset = 0x4, fixed_abs, tag = 'smem constant byte address 0x4 - core index']
  #allocation1 [shape = 'u32[144,128]{1,0:T(1,128)}', space=vmem, size = 0x12000, scoped, tag = 'internal scratch']
  %s0 = inlined_call_operand.vmem [shape: f32[64,16], index: 0, kind: input, shape index: {}]
  %s1 = inlined_call_operand.vmem [shape: f32[16,32], index: 1, kind: input, shape index: {}]
  %s2 = inlined_call_operand.vmem [shape: f32[1,32], index: 2, kind: input, shape index: {}]
  %s3 = inlined_call_operand.vmem [shape: f32[32,128], index: 3, kind: input, shape index: {}]
  %s4 = inlined_call_operand.vmem [shape: f32[1,128], index: 4, kind: input, shape index: {}]
  %s5 = inlined_call_operand.hbm [shape: f32[64,128], index: 5, kind: output, shape index: {}]
  %s6 = sld [smem:[#allocation0]]
  $region53: #{tpu_custom_call.1} parent=0
    _
  %s8 = ssub.s32 1, %s6
  %s9 = scalar_select 0, %s8, %s6
  $region1: #{tpu_custom_call.1} parent=0
    #allocation2 [shape = 'u8[16384]{0}', space=vmem, size = 0x4000, scoped, tag = 'output window, operand 0']
    #allocation3 [shape = 's32[2]{0}', space=sflag, size = 0x8, scoped, tag = 'scoped memory for tpu_custom_call.1']
    %10 = vsyncpa [#allocation3], 0
    %s11 = scalar_lea.sflag [#allocation3], 1
    %12 = vsyncpa %s11, 0
    loop: start=0, step=1, limit=6
    $region2: #{tpu_custom_call.1} parent=1 // loop_pre_header
      _
    $region3: #{tpu_custom_call.1} parent=1 // loop_header
      %s14 = sphi 0, %s18
      %p15 = scmp.ge.s32.totalorder %s14, 6
      %s24 = sphi 0, %s26
      %s27 = sphi 0, %s24
      %s28 = sphi 0, %s27
      %s44 = sphi 0, %s28
      %s48 = sphi 0, %s48
      %s50 = sphi 0, %s48
      %s51 = sphi 0, %s50
      %s65 = sphi 0, %s51
      %s69 = sphi 0, %s69
      %s71 = sphi 0, %s69
      %s72 = sphi 0, %s71
      %s86 = sphi 0, %s72
      %s90 = sphi 0, %s90
      %s92 = sphi 0, %s90
      %s93 = sphi 0, %s92
      %s107 = sphi 0, %s93
      %s111 = sphi 0, %s111
      %s113 = sphi 0, %s111
      %s114 = sphi 0, %s113
      %s128 = sphi 0, %s114
      %s134 = sphi 0, %s136
      %s137 = sphi 0, %s134
      %s138 = sphi 0, %s137
      %s154 = sphi 0, %s138
    $region4: #{tpu_custom_call.1} parent=1 // loop_header_branch
      %17 = sbr.rel (%p15) target = $region8
    $region5: #{tpu_custom_call.1} parent=1 // loop_body
      %s19 = ssub.s32 %s14, 1
      %s20 = ssub.s32 %s14, 2
      %s21 = sadd.s32 %s14, 1
      %s22 = ssub.s32 %s14, %s21
      %p23 = scmp.eq.s32.totalorder %s22, 0
      %s25 = sadd.s32 %s24, 1
      %s26 = scalar_select %p23, %s24, %s25
      %p29 = pneg %p23
      %p30 = scmp.eq.s32.totalorder %s14, 3
      %p31 = por %p29, %p30
      %p32 = scmp.ne.s32.totalorder %s24, %s27
      %p33 = scmp.eq.s32.totalorder %s14, 0
      %p34 = por %p32, %p33
      %p35 = scmp.ne.s32.totalorder %s24, %s27
      %p36 = scmp.eq.s32.totalorder %s19, 3
      %p37 = por %p35, %p36
      %p38 = scmp.ne.s32.totalorder %s27, %s28
      %p39 = scmp.eq.s32.totalorder %s19, 0
      %p40 = por %p38, %p39
      %p41 = scmp.ne.s32.totalorder %s27, %s28
      %p42 = scmp.eq.s32.totalorder %s20, 3
      %p43 = por %p41, %p42
      %p45 = scmp.ne.s32.totalorder %s28, %s44
      %p46 = scmp.eq.s32.totalorder %s20, 0
      %p47 = por %p45, %p46
      %s49 = sadd.s32 %s48, 1
      %p52 = scmp.eq.s32.totalorder %s14, 3
      %p53 = scmp.ne.s32.totalorder %s48, %s50
      %p54 = scmp.eq.s32.totalorder %s14, 0
      %p55 = por %p53, %p54
      %p56 = scmp.ne.s32.totalorder %s48, %s50
      %p57 = scmp.eq.s32.totalorder %s19, 3
      %p58 = por %p56, %p57
      %p59 = scmp.ne.s32.totalorder %s50, %s51
      %p60 = scmp.eq.s32.totalorder %s19, 0
      %p61 = por %p59, %p60
      %p62 = scmp.ne.s32.totalorder %s50, %s51
      %p63 = scmp.eq.s32.totalorder %s20, 3
      %p64 = por %p62, %p63
      %p66 = scmp.ne.s32.totalorder %s51, %s65
      %p67 = scmp.eq.s32.totalorder %s20, 0
      %p68 = por %p66, %p67
      %s70 = sadd.s32 %s69, 1
      %p73 = scmp.eq.s32.totalorder %s14, 3
      %p74 = scmp.ne.s32.totalorder %s69, %s71
      %p75 = scmp.eq.s32.totalorder %s14, 0
      %p76 = por %p74, %p75
      %p77 = scmp.ne.s32.totalorder %s69, %s71
      %p78 = scmp.eq.s32.totalorder %s19, 3
      %p79 = por %p77, %p78
      %p80 = scmp.ne.s32.totalorder %s71, %s72
      %p81 = scmp.eq.s32.totalorder %s19, 0
      %p82 = por %p80, %p81
      %p83 = scmp.ne.s32.totalorder %s71, %s72
      %p84 = scmp.eq.s32.totalorder %s20, 3
      %p85 = por %p83, %p84
      %p87 = scmp.ne.s32.totalorder %s72, %s86
      %p88 = scmp.eq.s32.totalorder %s20, 0
      %p89 = por %p87, %p88
      %s91 = sadd.s32 %s90, 1
      %p94 = scmp.eq.s32.totalorder %s14, 3
      %p95 = scmp.ne.s32.totalorder %s90, %s92
      %p96 = scmp.eq.s32.totalorder %s14, 0
      %p97 = por %p95, %p96
      %p98 = scmp.ne.s32.totalorder %s90, %s92
      %p99 = scmp.eq.s32.totalorder %s19, 3
      %p100 = por %p98, %p99
      %p101 = scmp.ne.s32.totalorder %s92, %s93
      %p102 = scmp.eq.s32.totalorder %s19, 0
      %p103 = por %p101, %p102
      %p104 = scmp.ne.s32.totalorder %s92, %s93
      %p105 = scmp.eq.s32.totalorder %s20, 3
      %p106 = por %p104, %p105
      %p108 = scmp.ne.s32.totalorder %s93, %s107
      %p109 = scmp.eq.s32.totalorder %s20, 0
      %p110 = por %p108, %p109
      %s112 = sadd.s32 %s111, 1
      %p115 = scmp.eq.s32.totalorder %s14, 3
      %p116 = scmp.ne.s32.totalorder %s111, %s113
      %p117 = scmp.eq.s32.totalorder %s14, 0
      %p118 = por %p116, %p117
      %p119 = scmp.ne.s32.totalorder %s111, %s113
      %p120 = scmp.eq.s32.totalorder %s19, 3
      %p121 = por %p119, %p120
      %p122 = scmp.ne.s32.totalorder %s113, %s114
      %p123 = scmp.eq.s32.totalorder %s19, 0
      %p124 = por %p122, %p123
      %p125 = scmp.ne.s32.totalorder %s113, %s114
      %p126 = scmp.eq.s32.totalorder %s20, 3
      %p127 = por %p125, %p126
      %p129 = scmp.ne.s32.totalorder %s114, %s128
      %p130 = scmp.eq.s32.totalorder %s20, 0
      %p131 = por %p129, %p130
      %s132 = ssub.s32 %s14, %s21
      %p133 = scmp.eq.s32.totalorder %s132, 0
      %s135 = sadd.s32 %s134, 1
      %s136 = scalar_select %p133, %s134, %s135
      %p139 = pneg %p133
      %p140 = scmp.eq.s32.totalorder %s14, 3
      %p141 = por %p139, %p140
      %p142 = scmp.ne.s32.totalorder %s134, %s137
      %p143 = scmp.eq.s32.totalorder %s14, 0
      %p144 = por %p142, %p143
      %p145 = scmp.ne.s32.totalorder %s134, %s137
      %p146 = scmp.eq.s32.totalorder %s19, 3
      %p147 = por %p145, %p146
      %p148 = scmp.ne.s32.totalorder %s137, %s138
      %p149 = scmp.eq.s32.totalorder %s19, 0
      %p150 = por %p148, %p149
      %p151 = scmp.ne.s32.totalorder %s137, %s138
      %p152 = scmp.eq.s32.totalorder %s20, 3
      %p153 = por %p151, %p152
      %p155 = scmp.ne.s32.totalorder %s138, %s154
      %p156 = scmp.eq.s32.totalorder %s20, 0
      %p157 = por %p155, %p156
      %p158 = scmp.le.s32.totalorder 1, %s14
      %p159 = scmp.lt.s32.totalorder %s14, 5
      %p160 = pnand %p158, %p159
      %p161 = pneg %p160
      // Predicated region
      $region9: #{tpu_custom_call.1} parent=5 // pred_check
        _
      $region10: #{tpu_custom_call.1} parent=5 // pred_check_branch
        %163 = sbr.rel (%p160) target = $region12
      $region11: #{tpu_custom_call.1} parent=5 // pred_region
        %s164 = ssub.s32 %s14, 1
        // Predicated region
        $region13: #{tpu_custom_call.1} parent=11 // pred_check
          %p165 = pneg %p61
        $region14: #{tpu_custom_call.1} parent=11 // pred_check_branch
          %167 = sbr.rel (%p165) target = $region16
        $region15: #{tpu_custom_call.1} parent=11 // pred_region
          _
        $region16: #{tpu_custom_call.1} parent=11 // pred_fallthru
          _
        // Predicated region
        $region17: #{tpu_custom_call.1} parent=11 // pred_check
          %p168 = pneg %p82
        $region18: #{tpu_custom_call.1} parent=11 // pred_check_branch
          %170 = sbr.rel (%p168) target = $region20
        $region19: #{tpu_custom_call.1} parent=11 // pred_region
          _
        $region20: #{tpu_custom_call.1} parent=11 // pred_fallthru
          _
        // Predicated region
        $region21: #{tpu_custom_call.1} parent=11 // pred_check
          %p171 = pneg %p103
        $region22: #{tpu_custom_call.1} parent=11 // pred_check_branch
          %173 = sbr.rel (%p171) target = $region24
        $region23: #{tpu_custom_call.1} parent=11 // pred_region
          _
        $region24: #{tpu_custom_call.1} parent=11 // pred_fallthru
          _
        // Predicated region
        $region25: #{tpu_custom_call.1} parent=11 // pred_check
          %p174 = pneg %p124
        $region26: #{tpu_custom_call.1} parent=11 // pred_check_branch
          %176 = sbr.rel (%p174) target = $region28
        $region27: #{tpu_custom_call.1} parent=11 // pred_region
          _
        $region28: #{tpu_custom_call.1} parent=11 // pred_fallthru
          _
      $region12: #{tpu_custom_call.1} parent=5 // pred_fallthru
        _
      %p177 = scmp.lt.s32.totalorder %s14, 4
      // Predicated region
      $region29: #{tpu_custom_call.1} parent=5 // pred_check
        %p178 = pneg %p177
      $region30: #{tpu_custom_call.1} parent=5 // pred_check_branch
        %180 = sbr.rel (%p178) target = $region32
      $region31: #{tpu_custom_call.1} parent=5 // pred_region
        // Predicated region
        $region33: #{tpu_custom_call.1} parent=31 // pred_check
          %p181 = pneg %p34
        $region34: #{tpu_custom_call.1} parent=31 // pred_check_branch
          %183 = sbr.rel (%p181) target = $region36
        $region35: #{tpu_custom_call.1} parent=31 // pred_region
          %s184 = smul.u32 2, %s14
          %p185 = scmp.lt.s32.totalorder %s184, 7
          %s186 = scalar_select %p185, %s184, 7
          %s187 = smul.addr %s186, 8
          %s188 = scalar_lea.vmem %s0, %s187
          %s189 = smul.u32 2, %s14
        $region36: #{tpu_custom_call.1} parent=31 // pred_fallthru
          _
      $region32: #{tpu_custom_call.1} parent=5 // pred_fallthru
        _
      %p190 = scmp.le.s32.totalorder 1, %s14
      %p191 = scmp.lt.s32.totalorder %s14, 5
      %p192 = pnand %p190, %p191
      %p193 = pneg %p192
      // Predicated region
      $region37: #{tpu_custom_call.1} parent=5 // pred_check
        _
      $region38: #{tpu_custom_call.1} parent=5 // pred_check_branch
        %195 = sbr.rel (%p192) target = $region40
      $region39: #{tpu_custom_call.1} parent=5 // pred_region
        %s196 = ssub.s32 %s14, 1
        %s197 = smul.u32 2, %s19
        %p198 = scmp.lt.s32.totalorder %s197, 7
        %s199 = scalar_select %p198, %s197, 7
        %s200 = smul.addr %s199, 8
        %s201 = scalar_lea.vmem %s0, %s200
        %p202 = pneg %p40
        %p203 = pneg %p37
        %p204 = pneg %p61
        %p205 = pneg %p58
        %p206 = pneg %p82
        %p207 = pneg %p79
        %p208 = pneg %p103
        %p209 = pneg %p100
        %p210 = pneg %p124
        %p211 = pneg %p121
        %p212 = pneg %p150
        %p213 = pneg %p147
        %s214 = sand.u32 %s137, 1
        %s215 = scalar_lea.sflag [#allocation3], %s214
        %s216 = sand.u32 %s137, 1
        %s217 = smul.addr %s216, 16
        %s218 = scalar_lea.vmem [#allocation2], %s217
        %s219 = smul.u32 2, %s19
        %p220 = scmp.lt.s32.totalorder %s219, 7
        %s221 = scalar_select %p220, %s219, 7
        %s222 = smul.addr %s221, 8
        %s223 = scalar_lea.vmem %s0, %s222
        %s224 = smul.u32 2, %s19
        %s225 = smul.u32 2, %s19
        %v226 = vld [vmem:[%s223] sm:$0xff]
        %v227 = vld [vmem:[%s223 + $0x8] sm:$0xff]
        %v228 = vld [vmem:[%s1] sm:$0xff]
        %v229 = vld [vmem:[%s1 + $0x8] sm:$0xff]
        %v230 = vld [vmem:[%s2] sm:$0x1]
        %v232 = vlaneseq
        %v233 = vshrl.u32 %v232, 7
        %v234 = vsub.s32 0, %v233
        %v235 = vrot.slane %v230, %v234
        %vm237 = vcmask 130048
        %v239 = vsel %vm237, %v226, 0
        %v242 = vsel %vm237, %v227, 0
        %244 = vmatprep.subr.mxu0 0.0
        %245 = vmatpush1.msra.mxu0 %v228
        %246 = vmatprep.subr.mxu0 0.0
        %247 = vmatpush1.msra.mxu0 %v229
        %248 = vmatprep.subr.mxu0 0.0
        %249 = vmatpush1.msra.mxu0 0.0
        %250 = vmatprep.subr.mxu0 0.0
        %251 = vmatpush1.msra.mxu0 0.0
        %252 = vmatprep.subr.mxu0 0.0
        %253 = vmatpush1.msra.mxu0 0.0
        %254 = vmatprep.subr.mxu0 0.0
        %255 = vmatpush1.msra.mxu0 0.0
        %256 = vmatprep.subr.mxu0 0.0
        %257 = vmatpush1.msra.mxu0 0.0
        %258 = vmatprep.subr.mxu0 0.0
        %259 = vmatpush1.msra.mxu0 0.0
        %260 = vmatprep.subr.mxu0 0.0
        %261 = vmatpush1.msra.mxu0 0.0
        %262 = vmatprep.subr.mxu0 0.0
        %263 = vmatpush1.msra.mxu0 0.0
        %264 = vmatprep.subr.mxu0 0.0
        %265 = vmatpush1.msra.mxu0 0.0
        %266 = vmatprep.subr.mxu0 0.0
        %267 = vmatpush1.msra.mxu0 0.0
        %268 = vmatprep.subr.mxu0 0.0
        %269 = vmatpush1.msra.mxu0 0.0
        %270 = vmatprep.subr.mxu0 0.0
        %271 = vmatpush1.msra.mxu0 0.0
        %272 = vmatprep.subr.mxu0 0.0
        %273 = vmatpush1.msra.mxu0 0.0
        %274 = vmatprep.subr.mxu0 0.0
        %275 = vmatpush1.msra.mxu0 0.0
        %276 = vmatprep.subr.mxu0 0.0
        %277 = vmatpush1.msra.mxu0 0.0
        %278 = vmatprep.subr.mxu0 0.0
        %279 = vmatpush1.msra.mxu0 0.0
        %280 = vmatprep.subr.mxu0 0.0
        %281 = vmatpush1.msra.mxu0 0.0
        %282 = vmatprep.subr.mxu0 0.0
        %283 = vmatpush1.msra.mxu0 0.0
        %284 = vmatprep.subr.mxu0 0.0
        %285 = vmatpush1.msra.mxu0 0.0
        %286 = vmatprep.subr.mxu0 0.0
        %287 = vmatpush1.msra.mxu0 0.0
        %288 = vmatprep.subr.mxu0 0.0
        %289 = vmatpush1.msra.mxu0 0.0
        %290 = vmatprep.subr.mxu0 0.0
        %291 = vmatpush1.msra.mxu0 0.0
        %292 = vmatprep.subr.mxu0 0.0
        %293 = vmatpush1.msra.mxu0 0.0
        %294 = vmatprep.subr.mxu0 0.0
        %295 = vmatpush1.msra.mxu0 0.0
        %296 = vmatprep.subr.mxu0 0.0
        %297 = vmatpush1.msra.mxu0 0.0
        %298 = vmatprep.subr.mxu0 0.0
        %299 = vmatpush1.msra.mxu0 0.0
        %300 = vmatprep.subr.mxu0 0.0
        %301 = vmatpush1.msra.mxu0 0.0
        %302 = vmatprep.subr.mxu0 0.0
        %303 = vmatpush1.msra.mxu0 0.0
        %304 = vmatprep.subr.mxu0 0.0
        %305 = vmatpush1.msra.mxu0 0.0
        %306 = vmatprep.subr.mxu0 0.0
        %307 = vmatpush1.msra.mxu0 0.0
        %308 = vmatprep.mubr.f32.mxu0 0.0
        %309 = vmatmul.mubr.f32.gmra.mrb[0].mxu0 %v239
        %v310 = vpop.f32.mrb[0].mxu0
        %v311 = vadd.f32 %v235, %v310
        %v312 = vpop.f32.mrb[0].mxu0
        %313 = vmatprep.mubr.f32.mxu0 0.0
        %314 = vmatmul.mubr.f32.gmra.mrb[0].mxu0 %v242
        %v315 = vpop.f32.mrb[0].mxu0
        %v316 = vadd.f32 %v235, %v315
        %v317 = vpop.f32.mrb[0].mxu0
        %318 = vdwg.mxu0
        %v319 = vtanh.pop %v311
        %v320 = vtanh.pop %v316
        %v321 = vld [vmem:[%s3] sm:$0xff]
        %v322 = vld [vmem:[%s3 + $0x8] sm:$0xff]
        %v323 = vld [vmem:[%s3 + $0x10] sm:$0xff]
        %v324 = vld [vmem:[%s3 + $0x18] sm:$0xff]
        %v325 = vld [vmem:[%s4] sm:$0x1]
        %v327 = vlaneseq
        %v328 = vshrl.u32 %v327, 7
        %v329 = vsub.s32 0, %v328
        %v330 = vrot.slane %v325, %v329
        %vm332 = vcmask 261120
        %v334 = vsel %vm332, %v319, 0
        %v337 = vsel %vm332, %v320, 0
        %339 = vmatprep.subr.mxu0 0.0
        %340 = vmatpush1.msra.mxu0 %v321
        %341 = vmatprep.subr.mxu0 0.0
        %342 = vmatpush1.msra.mxu0 %v322
        %343 = vmatprep.subr.mxu0 0.0
        %344 = vmatpush1.msra.mxu0 %v323
        %345 = vmatprep.subr.mxu0 0.0
        %346 = vmatpush1.msra.mxu0 %v324
        %347 = vmatprep.subr.mxu0 0.0
        %348 = vmatpush1.msra.mxu0 0.0
        %349 = vmatprep.subr.mxu0 0.0
        %350 = vmatpush1.msra.mxu0 0.0
        %351 = vmatprep.subr.mxu0 0.0
        %352 = vmatpush1.msra.mxu0 0.0
        %353 = vmatprep.subr.mxu0 0.0
        %354 = vmatpush1.msra.mxu0 0.0
        %355 = vmatprep.subr.mxu0 0.0
        %356 = vmatpush1.msra.mxu0 0.0
        %357 = vmatprep.subr.mxu0 0.0
        %358 = vmatpush1.msra.mxu0 0.0
        %359 = vmatprep.subr.mxu0 0.0
        %360 = vmatpush1.msra.mxu0 0.0
        %361 = vmatprep.subr.mxu0 0.0
        %362 = vmatpush1.msra.mxu0 0.0
        %363 = vmatprep.subr.mxu0 0.0
        %364 = vmatpush1.msra.mxu0 0.0
        %365 = vmatprep.subr.mxu0 0.0
        %366 = vmatpush1.msra.mxu0 0.0
        %367 = vmatprep.subr.mxu0 0.0
        %368 = vmatpush1.msra.mxu0 0.0
        %369 = vmatprep.subr.mxu0 0.0
        %370 = vmatpush1.msra.mxu0 0.0
        %371 = vmatprep.subr.mxu0 0.0
        %372 = vmatpush1.msra.mxu0 0.0
        %373 = vmatprep.subr.mxu0 0.0
        %374 = vmatpush1.msra.mxu0 0.0
        %375 = vmatprep.subr.mxu0 0.0
        %376 = vmatpush1.msra.mxu0 0.0
        %377 = vmatprep.subr.mxu0 0.0
        %378 = vmatpush1.msra.mxu0 0.0
        %379 = vmatprep.subr.mxu0 0.0
        %380 = vmatpush1.msra.mxu0 0.0
        %381 = vmatprep.subr.mxu0 0.0
        %382 = vmatpush1.msra.mxu0 0.0
        %383 = vmatprep.subr.mxu0 0.0
        %384 = vmatpush1.msra.mxu0 0.0
        %385 = vmatprep.subr.mxu0 0.0
        %386 = vmatpush1.msra.mxu0 0.0
        %387 = vmatprep.subr.mxu0 0.0
        %388 = vmatpush1.msra.mxu0 0.0
        %389 = vmatprep.subr.mxu0 0.0
        %390 = vmatpush1.msra.mxu0 0.0
        %391 = vmatprep.subr.mxu0 0.0
        %392 = vmatpush1.msra.mxu0 0.0
        %393 = vmatprep.subr.mxu0 0.0
        %394 = vmatpush1.msra.mxu0 0.0
        %395 = vmatprep.subr.mxu0 0.0
        %396 = vmatpush1.msra.mxu0 0.0
        %397 = vmatprep.subr.mxu0 0.0
        %398 = vmatpush1.msra.mxu0 0.0
        %399 = vmatprep.subr.mxu0 0.0
        %400 = vmatpush1.msra.mxu0 0.0
        %401 = vmatprep.subr.mxu0 0.0
        %402 = vmatpush1.msra.mxu0 0.0
        %403 = vmatprep.mubr.f32.mxu0 0.0
        %404 = vmatmul.mubr.f32.gmra.mrb[0].mxu0 %v334
        %v405 = vpop.f32.mrb[0].mxu0
        %v406 = vadd.f32 %v330, %v405
        %v407 = vpop.f32.mrb[0].mxu0
        %408 = vmatprep.mubr.f32.mxu0 0.0
        %409 = vmatmul.mubr.f32.gmra.mrb[0].mxu0 %v337
        %v410 = vpop.f32.mrb[0].mxu0
        %v411 = vadd.f32 %v330, %v410
        %v412 = vpop.f32.mrb[0].mxu0
        %413 = vdwg.mxu0
        %v414 = vlaneseq
        %v415 = vand.u32 %v414, 127
        %vm416 = vcmp.lt.s32.totalorder %v415, 8
        %vm417 = vcmp.ge.s32.totalorder %v415, 8
        %vm418 = vcmp.lt.s32.totalorder %v415, 16
        %vm419 = vmand %vm417, %vm418
        %vm420 = vcmp.ge.s32.totalorder %v415, 16
        %vm421 = vcmp.lt.s32.totalorder %v415, 24
        %vm422 = vmand %vm420, %vm421
        %v423 = vsel %vm416, %v406, -inf
        %v424 = vsel %vm416, %v411, -inf
        %425 = vmax.xlane.f32.xlu0 %v423
        %v426 = vpop.xlane.xlu0 %425
        %427 = vmax.xlane.f32.xlu0 %v424
        %v428 = vpop.xlane.xlu0 %427
        %v429 = vsub.f32 %v423, %v426
        %v430 = vsub.f32 %v424, %v428
        %v431 = vmul.f32 %v429, 1.442695
        %v432 = vpow.pop %v431
        %v433 = vmul.f32 %v430, 1.442695
        %v434 = vpow.pop %v433
        %435 = vadd.xlane.f32.xlu0 %v432
        %v436 = vpop.xlane.xlu0 %435
        %437 = vadd.xlane.f32.xlu0 %v434
        %v438 = vpop.xlane.xlu0 %437
        %v439 = vrcp.pop %v436
        %v440 = vrcp.pop %v438
        %v441 = vmul.f32 %v432, %v439
        %v442 = vmul.f32 %v434, %v440
        %v443 = vsel %vm419, %v406, 0.0
        %v444 = vsel %vm419, %v411, 0.0
        %v445 = vmul.f32 %v443, 1.442695
        %v446 = vpow.pop %v445
        %v447 = vmul.f32 %v444, 1.442695
        %v448 = vpow.pop %v447
        %v449 = vsel %vm422, %v406, 0.0
        %v450 = vsel %vm422, %v411, 0.0
        %v451 = vsel %vm419, %v446, %v449
        %v452 = vsel %vm419, %v448, %v450
        %v453 = vsel %vm416, %v441, %v451
        %v454 = vsel %vm416, %v442, %v452
        %455 = vst [vmem:[%s218] sm:$0xff] %v453
        %456 = vst [vmem:[%s218 + $0x8] sm:$0xff] %v454
        %s457 = sand.u32 %s137, 1
        %s458 = scalar_lea.sflag [#allocation3], %s457
        %s459 = sand.u32 %s137, 1
        %s460 = smul.addr %s459, 16
        %s461 = scalar_lea.vmem [#allocation2], %s460
        // Predicated region
        $region41: #{tpu_custom_call.1} parent=39 // pred_check
          %p462 = pneg %p147
        $region42: #{tpu_custom_call.1} parent=39 // pred_check_branch
          %464 = sbr.rel (%p462) target = $region44
        $region43: #{tpu_custom_call.1} parent=39 // pred_region
          %s465 = smul.u32 2, %s19
          %s467 = ssub.s32 256, 256
          %468 = vsyncadd %s458, %s467
          %s469 = smul.addr %s465, 128
          %s470 = scalar_lea.hbm %s5, %s469
          %s471 = sshll.u32 %s461, 4
          %s472 = int_to_ptr.vmem [resolvable:$true] %s471
          %477 = dma.vmem_to_hbm [thread:$0]  %s472, 256, %s470, %s458, 128, 128, 8
        $region44: #{tpu_custom_call.1} parent=39 // pred_fallthru
          _
      $region40: #{tpu_custom_call.1} parent=5 // pred_fallthru
        _
      %p478 = scmp.le.s32.totalorder 2, %s14
      // Predicated region
      $region45: #{tpu_custom_call.1} parent=5 // pred_check
        %p479 = pneg %p478
      $region46: #{tpu_custom_call.1} parent=5 // pred_check_branch
        %481 = sbr.rel (%p479) target = $region48
      $region47: #{tpu_custom_call.1} parent=5 // pred_region
        %s482 = ssub.s32 %s14, 2
        // Predicated region
        $region49: #{tpu_custom_call.1} parent=47 // pred_check
          %p483 = pneg %p153
        $region50: #{tpu_custom_call.1} parent=47 // pred_check_branch
          %485 = sbr.rel (%p483) target = $region52
        $region51: #{tpu_custom_call.1} parent=47 // pred_region
          %s486 = sand.u32 %s138, 1
          %s487 = scalar_lea.sflag [#allocation3], %s486
          %s488 = sand.u32 %s138, 1
          %s489 = smul.addr %s488, 16
          %s490 = scalar_lea.vmem [#allocation2], %s489
          %491 = dma.done %s487, 256
        $region52: #{tpu_custom_call.1} parent=47 // pred_fallthru
          _
      $region48: #{tpu_custom_call.1} parent=5 // pred_fallthru
        _
    $region6: #{tpu_custom_call.1} parent=1 // loop_footer
      %s18 = sadd.s32 1, %s14
    $region7: #{tpu_custom_call.1} parent=1 // loop_footer_branch
      %13 = sbr.rel target = $region3
    $region8: #{tpu_custom_call.1} parent=1 // loop_exit
      _
    %492 = vsyncpa [#allocation3], 1
    %s493 = scalar_lea.sflag [#allocation3], 1
    %494 = vsyncpa %s493, 1

</llo_original>
